<compile_context>
chip_gen: v7x
topology: tpu7x:2x2x1
jax: 0.10.0
libtpu: 0.0.40
codegen_flags: <defaults>
</compile_context>

<pallas_src>
import math

import jax
import jax.numpy as jnp
from jax import lax
from jax.experimental import pallas as pl
from jax.experimental.pallas import tpu as pltpu

LANE = 128                     # lane width (last dim)
ROW_TILE_MAX = 4096            # rows per grid step (4096*128*4B = 2 MiB / f32 stream)
CHUNK_ROWS = 256               # inner strip rows (multiple of 32 -> any dtype packing)
SHARD_MIN_ROWS = 2048          # use 2 grid shards (v7x megacore) above this many rows
PAD_FALLBACK_ELEMS = 1 << 20   # below this, padding the array is cheaper than masking
VMEM_LIMIT_BYTES = 32 * 1024 * 1024


def _cdiv(a, b):
    return -(-a // b)


def _round_up(a, b):
    return _cdiv(a, b) * b


def _sublane_granule(dtype):
    # Native packing: (8,128) for 32-bit, (16,128) for 16-bit, (32,128) for 8-bit.
    return max(8, 32 // jnp.dtype(dtype).itemsize)


def _make_kernel(*, row_tile, chunk, tiles_per_shard, rows_valid, need_mask):
    """Build the partial-sum kernel (all tiling parameters are static)."""
    n_chunks = row_tile // chunk

    def kernel(x_ref, y_ref, out_ref):
        i = pl.program_id(1)

        @pl.when(i == 0)
        def _init():
            out_ref[...] = jnp.zeros_like(out_ref)

        if need_mask:
            p = pl.program_id(0)
            # Logical (unclamped) first row of this grid step; phantom / ragged
            # rows are masked out by comparing against rows_valid.
            tile_row0 = (p * tiles_per_shard + i) * row_tile
            row_iota = lax.broadcasted_iota(jnp.int32, (chunk, LANE), 0)  # hoisted

        def process(r0):
            xs = x_ref[pl.ds(r0, chunk), :].astype(jnp.float32)
            ys = y_ref[pl.ds(r0, chunk), :].astype(jnp.float32)
            if need_mask:
                valid = (tile_row0 + r0 + row_iota) < rows_valid
                xs = jnp.where(valid, xs, 0.0)
                ys = jnp.where(valid, ys, 0.0)
            # One shared transcendental feeds both the stable BCE and sigmoid.
            e = jnp.exp(-jnp.abs(xs))                              # EUP
            bce = jnp.maximum(xs, 0.0) - xs * ys + jnp.log1p(e)    # stable BCE-with-logits
            inv = pl.reciprocal(1.0 + e, approx=True)              # EUP vrcp, not VALU divide
            pr = jnp.where(xs >= 0.0, inv, e * inv)                # stable sigmoid(x)

            grp = chunk // 8

            def fold(v):
                # (chunk, 128) -> (8, 128): sublane-group VPU adds, no cross-lane reduce.
                return jnp.sum(v.reshape(grp, 8, LANE), axis=0)

            out_ref[0, 0] += fold(bce)
            out_ref[0, 1] += fold(ys * pr)
            out_ref[0, 2] += fold(ys + pr)     # sum(targets) + sum(sigmoid) merged

        if n_chunks == 1:
            process(0)
        else:
            def body(c, carry):
                process(pl.multiple_of(c * chunk, chunk))
                return carry

            lax.fori_loop(0, n_chunks, body, 0, unroll=True)

    return kernel


def _partial_sums(x2d, y2d, *, num_shards, tiles_per_shard, row_tile, chunk,
                  rows_valid, need_mask):
    rows_data = x2d.shape[0]
    last_tile = _cdiv(rows_data, row_tile) - 1
    grid_tiles = num_shards * tiles_per_shard

    if grid_tiles - 1 > last_tile:
        # Phantom grid steps (tile index past the data) are clamped onto the last
        # real tile so their DMA stays in bounds; their contribution is fully
        # masked out in-kernel via the logical row index.
        def in_idx(p, i):
            return (jnp.minimum(p * tiles_per_shard + i, last_tile), 0)
    else:
        def in_idx(p, i):
            return (p * tiles_per_shard + i, 0)

    kernel = _make_kernel(row_tile=row_tile, chunk=chunk,
                          tiles_per_shard=tiles_per_shard,
                          rows_valid=rows_valid, need_mask=need_mask)

    return pl.pallas_call(
        kernel,
        out_shape=jax.ShapeDtypeStruct((num_shards, 3, 8, LANE), jnp.float32),
        grid_spec=pltpu.PrefetchScalarGridSpec(
            num_scalar_prefetch=0,
            grid=(num_shards, tiles_per_shard),
            in_specs=[pl.BlockSpec((row_tile, LANE), in_idx),
                      pl.BlockSpec((row_tile, LANE), in_idx)],
            out_specs=pl.BlockSpec((1, 3, 8, LANE), lambda p, i: (p, 0, 0, 0)),
        ),
        compiler_params=pltpu.CompilerParams(
            dimension_semantics=("parallel", "arbitrary"),
            vmem_limit_bytes=VMEM_LIMIT_BYTES),
    )(x2d, y2d)


def bce_dice_loss(outputs, targets, *, eps=1e-7, threshold=None,
                  bce_weight=0.5, dice_weight=0.5, soften=0.0):
    """Matches BCEDiceLoss.forward (dict when both weights are nonzero)."""
    if bce_weight == 0 and dice_weight == 0:
        raise ValueError(
            "Both bce_weight and dice_weight cannot be equal to 0 at the same time.")
    # TODO(synk): threshold is not None (hard-thresholded dice) not implemented;
    # the module default (threshold=None) is what is reproduced here.
    assert threshold is None

    n = outputs.size
    x = outputs.reshape(-1)
    y = targets.reshape(-1)
    # Logits must be floating; targets stream at their native (narrow) dtype and
    # are upcast inside the kernel.  bool -> int8 (bool blocks are awkward).
    if not jnp.issubdtype(x.dtype, jnp.floating):
        x = x.astype(jnp.float32)
    if y.dtype == jnp.bool_:
        y = y.astype(jnp.int8)

    granule = max(_sublane_granule(x.dtype), _sublane_granule(y.dtype))

    rows_exact = _cdiv(n, LANE)            # lane-rows needed to hold all n elements
    lane_pad = rows_exact * LANE - n       # 0..127 ragged elements in the last row

    # Tiling: big lane-dense row tiles; shard across 2 TCs when there is enough work.
    num_shards = 2 if rows_exact >= SHARD_MIN_ROWS else 1
    per_shard = _cdiv(rows_exact, num_shards)
    tiles_per_shard = _cdiv(per_shard, ROW_TILE_MAX)
    ideal = _cdiv(per_shard, tiles_per_shard)
    if ideal >= CHUNK_ROWS:
        row_tile = _round_up(ideal, CHUNK_ROWS)   # CHUNK_ROWS is a multiple of 32
        chunk = CHUNK_ROWS
    else:
        row_tile = _round_up(ideal, granule)
        chunk = row_tile
    coverage = num_shards * tiles_per_shard * row_tile      # rows the grid covers
    pad_elems_total = coverage * LANE - n                   # masked + padded zeros

    # Padding the whole array re-streams it through HBM, so only do it when we
    # must (ragged last lane row) or when the input is small enough that the
    # extra pass is free; otherwise the kernel masks the ragged rows in place.
    must_pad = lane_pad > 0
    cheap_pad = coverage > rows_exact and n <= PAD_FALLBACK_ELEMS
    if must_pad or cheap_pad:
        extra = coverage * LANE - n
        x = jnp.pad(x, (0, extra))
        y = jnp.pad(y, (0, extra))
        rows_data = coverage
        need_mask = False
    else:
        rows_data = rows_exact
        need_mask = coverage > rows_exact

    x2d = x.reshape(rows_data, LANE)
    y2d = y.reshape(rows_data, LANE)

    partials = _partial_sums(x2d, y2d, num_shards=num_shards,
                             tiles_per_shard=tiles_per_shard, row_tile=row_tile,
                             chunk=chunk, rows_valid=rows_exact,
                             need_mask=need_mask)
    sums = jnp.sum(partials, axis=(0, 2, 3))   # (3,) tiny final reduce in JAX

    # Zero (padded or masked-out) elements contribute ln(2) to the BCE sum and
    # sigmoid(0)=0.5 to the union sum; nothing to the intersection.
    bce_sum = sums[0] - pad_elems_total * math.log(2.0)
    intersection = sums[1]
    union = sums[2] - 0.5 * pad_elems_total

    bce = bce_sum / n                                      # nn.BCEWithLogitsLoss (mean)
    dice_val = (2.0 * intersection + soften) / (union + eps + soften)
    dice_l = 1.0 - dice_val                                # DiceLoss

    if bce_weight == 0:
        return dice_weight * dice_l
    if dice_weight == 0:
        return bce_weight * bce
    loss = bce_weight * bce + dice_weight * dice_l
    return {"loss": loss, "bce": bce, "dice": dice_l}


def _reference(outputs, targets, eps=1e-7):
    x = outputs.astype(jnp.float32)
    y = targets.astype(jnp.float32)
    bce = jnp.mean(jnp.maximum(x, 0.0) - x * y + jnp.log1p(jnp.exp(-jnp.abs(x))))
    p = jax.nn.sigmoid(x)
    inter = jnp.sum(y * p)
    dice_val = (2.0 * inter) / (jnp.sum(y) + jnp.sum(p) + eps)
    dice_l = 1.0 - dice_val
    return {"loss": 0.5 * bce + 0.5 * dice_l, "bce": bce, "dice": dice_l}


if __name__ == "__main__":
    key = jax.random.PRNGKey(0)
    k1, k2 = jax.random.split(key)
    shape = (2, 4, 16, 16)                    # N, C, H, W logits
    outputs = jax.random.normal(k1, shape, dtype=jnp.float32)
    targets = (jax.random.uniform(k2, shape) > 0.5).astype(jnp.float32)

    result = bce_dice_loss(outputs, targets)
    result = jax.tree_util.tree_map(jax.block_until_ready, result)

    ref = _reference(outputs, targets)
    # rtol loosened vs v1 because sigmoid now uses the approx EUP reciprocal.
    for k in ("loss", "bce", "dice"):
        assert jnp.allclose(result[k], ref[k], rtol=1e-3, atol=1e-5), (
            k, float(result[k]), float(ref[k]))

    print("KERNEL_OK")
</pallas_src>

<mosaic_0001>
module attributes {stable_mosaic.version = 11 : i64} {
  func.func @kernel(%arg0: i32, %arg1: i32, %arg2: memref<16x128xf32, #tpu.memory_space<vmem>>, %arg3: memref<16x128xf32, #tpu.memory_space<vmem>>, %arg4: memref<1x3x8x128xf32, #tpu.memory_space<vmem>>) attributes {dimension_semantics = [#tpu.dimension_semantics<parallel>, #tpu.dimension_semantics<arbitrary>], iteration_bounds = array<i64: 1, 1>, scalar_prefetch = 0 : i64, scratch_operands = 0 : i64, tpu.core_type = #tpu.core_type<tc>, window_params = [{transform_indices = @transform_0, window_bounds = array<i64: 16, 128>}, {transform_indices = @transform_1, window_bounds = array<i64: 16, 128>}, {transform_indices = @transform_2, window_bounds = array<i64: 1, 3, 8, 128>}]} {
    %c0_i32 = arith.constant 0 : i32
    %0 = arith.cmpi eq, %arg1, %c0_i32 : i32
    %1 = arith.extui %0 : i1 to i32
    %c0_i32_0 = arith.constant 0 : i32
    %2 = arith.cmpi ne, %1, %c0_i32_0 : i32
    scf.if %2 {
      %cst_32 = arith.constant 0.000000e+00 : f32
      %48 = vector.broadcast %cst_32 : f32 to vector<1x3x8x128xf32>
      %c0_33 = arith.constant 0 : index
      %c0_34 = arith.constant 0 : index
      %c0_35 = arith.constant 0 : index
      %c0_36 = arith.constant 0 : index
      %49 = vector.load %arg4[%c0_33, %c0_34, %c0_35, %c0_36] : memref<1x3x8x128xf32, #tpu.memory_space<vmem>>, vector<1x3x8x128xf32>
      tpu.vector_store %arg4[%c0_33, %c0_34, %c0_35, %c0_36], %48 {strides = array<i32>} : memref<1x3x8x128xf32, #tpu.memory_space<vmem>>, vector<1x3x8x128xf32>,
    } else {
    }
    %c0 = arith.constant 0 : index
    %c0_1 = arith.constant 0 : index
    %3 = vector.load %arg2[%c0, %c0_1] : memref<16x128xf32, #tpu.memory_space<vmem>>, vector<16x128xf32>
    %c0_2 = arith.constant 0 : index
    %c0_3 = arith.constant 0 : index
    %4 = vector.load %arg3[%c0_2, %c0_3] : memref<16x128xf32, #tpu.memory_space<vmem>>, vector<16x128xf32>
    %5 = math.absf %3 : vector<16x128xf32>
    %cst = arith.constant 0.000000e+00 : f32
    %6 = vector.broadcast %cst : f32 to vector<16x128xf32>
    %7 = arith.subf %6, %5 : vector<16x128xf32>
    %8 = math.exp %7 : vector<16x128xf32>
    %cst_4 = arith.constant 0.000000e+00 : f32
    %9 = vector.broadcast %cst_4 : f32 to vector<16x128xf32>
    %10 = arith.maximumf %3, %9 : vector<16x128xf32>
    %11 = arith.mulf %3, %4 : vector<16x128xf32>
    %12 = arith.subf %10, %11 : vector<16x128xf32>
    %13 = math.log1p %8 : vector<16x128xf32>
    %14 = arith.addf %12, %13 : vector<16x128xf32>
    %cst_5 = arith.constant 1.000000e+00 : f32
    %15 = vector.broadcast %cst_5 : f32 to vector<16x128xf32>
    %16 = arith.addf %15, %8 : vector<16x128xf32>
    %17 = tpu.reciprocal %16 {approx = true} : vector<16x128xf32> -> vector<16x128xf32>
    %cst_6 = arith.constant 0.000000e+00 : f32
    %18 = vector.broadcast %cst_6 : f32 to vector<16x128xf32>
    %19 = arith.cmpf oge, %3, %18 : vector<16x128xf32>
    %20 = arith.mulf %8, %17 : vector<16x128xf32>
    %21 = arith.select %19, %17, %20 : vector<16x128xi1>, vector<16x128xf32>
    %c0_7 = arith.constant 0 : index
    %c0_8 = arith.constant 0 : index
    %c0_9 = arith.constant 0 : index
    %c0_10 = arith.constant 0 : index
    %22 = vector.load %arg4[%c0_7, %c0_8, %c0_9, %c0_10] : memref<1x3x8x128xf32, #tpu.memory_space<vmem>>, vector<1x1x8x128xf32>
    %23 = vector.shape_cast %22 : vector<1x1x8x128xf32> to vector<8x128xf32>
    %24 = vector.shape_cast %14 : vector<16x128xf32> to vector<2x8x128xf32>
    %cst_11 = arith.constant dense<0.000000e+00> : vector<8x128xf32>
    %25 = vector.multi_reduction <add>, %24, %cst_11 [0] : vector<2x8x128xf32> to vector<8x128xf32>
    %26 = arith.addf %23, %25 : vector<8x128xf32>
    %c0_12 = arith.constant 0 : index
    %c0_13 = arith.constant 0 : index
    %c0_14 = arith.constant 0 : index
    %c0_15 = arith.constant 0 : index
    %27 = vector.load %arg4[%c0_12, %c0_13, %c0_14, %c0_15] : memref<1x3x8x128xf32, #tpu.memory_space<vmem>>, vector<1x1x8x128xf32>
    %28 = vector.shape_cast %27 : vector<1x1x8x128xf32> to vector<8x128xf32>
    %29 = vector.shape_cast %26 : vector<8x128xf32> to vector<1x1x8x128xf32>
    tpu.vector_store %arg4[%c0_12, %c0_13, %c0_14, %c0_15], %29 {strides = array<i32>} : memref<1x3x8x128xf32, #tpu.memory_space<vmem>>, vector<1x1x8x128xf32>,
    %c0_16 = arith.constant 0 : index
    %c1 = arith.constant 1 : index
    %c0_17 = arith.constant 0 : index
    %c0_18 = arith.constant 0 : index
    %30 = vector.load %arg4[%c0_16, %c1, %c0_17, %c0_18] : memref<1x3x8x128xf32, #tpu.memory_space<vmem>>, vector<1x1x8x128xf32>
    %31 = vector.shape_cast %30 : vector<1x1x8x128xf32> to vector<8x128xf32>
    %32 = arith.mulf %4, %21 : vector<16x128xf32>
    %33 = vector.shape_cast %32 : vector<16x128xf32> to vector<2x8x128xf32>
    %cst_19 = arith.constant dense<0.000000e+00> : vector<8x128xf32>
    %34 = vector.multi_reduction <add>, %33, %cst_19 [0] : vector<2x8x128xf32> to vector<8x128xf32>
    %35 = arith.addf %31, %34 : vector<8x128xf32>
    %c0_20 = arith.constant 0 : index
    %c1_21 = arith.constant 1 : index
    %c0_22 = arith.constant 0 : index
    %c0_23 = arith.constant 0 : index
    %36 = vector.load %arg4[%c0_20, %c1_21, %c0_22, %c0_23] : memref<1x3x8x128xf32, #tpu.memory_space<vmem>>, vector<1x1x8x128xf32>
    %37 = vector.shape_cast %36 : vector<1x1x8x128xf32> to vector<8x128xf32>
    %38 = vector.shape_cast %35 : vector<8x128xf32> to vector<1x1x8x128xf32>
    tpu.vector_store %arg4[%c0_20, %c1_21, %c0_22, %c0_23], %38 {strides = array<i32>} : memref<1x3x8x128xf32, #tpu.memory_space<vmem>>, vector<1x1x8x128xf32>,
    %c0_24 = arith.constant 0 : index
    %c2 = arith.constant 2 : index
    %c0_25 = arith.constant 0 : index
    %c0_26 = arith.constant 0 : index
    %39 = vector.load %arg4[%c0_24, %c2, %c0_25, %c0_26] : memref<1x3x8x128xf32, #tpu.memory_space<vmem>>, vector<1x1x8x128xf32>
    %40 = vector.shape_cast %39 : vector<1x1x8x128xf32> to vector<8x128xf32>
    %41 = arith.addf %4, %21 : vector<16x128xf32>
    %42 = vector.shape_cast %41 : vector<16x128xf32> to vector<2x8x128xf32>
    %cst_27 = arith.constant dense<0.000000e+00> : vector<8x128xf32>
    %43 = vector.multi_reduction <add>, %42, %cst_27 [0] : vector<2x8x128xf32> to vector<8x128xf32>
    %44 = arith.addf %40, %43 : vector<8x128xf32>
    %c0_28 = arith.constant 0 : index
    %c2_29 = arith.constant 2 : index
    %c0_30 = arith.constant 0 : index
    %c0_31 = arith.constant 0 : index
    %45 = vector.load %arg4[%c0_28, %c2_29, %c0_30, %c0_31] : memref<1x3x8x128xf32, #tpu.memory_space<vmem>>, vector<1x1x8x128xf32>
    %46 = vector.shape_cast %45 : vector<1x1x8x128xf32> to vector<8x128xf32>
    %47 = vector.shape_cast %44 : vector<8x128xf32> to vector<1x1x8x128xf32>
    tpu.vector_store %arg4[%c0_28, %c2_29, %c0_30, %c0_31], %47 {strides = array<i32>} : memref<1x3x8x128xf32, #tpu.memory_space<vmem>>, vector<1x1x8x128xf32>,
    return
  }
  func.func @transform_0(%arg0: i32, %arg1: i32) -> (i32, i32) {
    %c1_i32 = arith.constant 1 : i32
    %0 = arith.muli %arg0, %c1_i32 : i32
    %1 = arith.addi %0, %arg1 : i32
    %c0_i32 = arith.constant 0 : i32
    %c0_i32_0 = arith.constant 0 : i32
    return %1, %c0_i32 : i32, i32
  }
  func.func @transform_1(%arg0: i32, %arg1: i32) -> (i32, i32) {
    %c1_i32 = arith.constant 1 : i32
    %0 = arith.muli %arg0, %c1_i32 : i32
    %1 = arith.addi %0, %arg1 : i32
    %c0_i32 = arith.constant 0 : i32
    %c0_i32_0 = arith.constant 0 : i32
    return %1, %c0_i32 : i32, i32
  }
  func.func @transform_2(%arg0: i32, %arg1: i32) -> (i32, i32, i32, i32) {
    %c0_i32 = arith.constant 0 : i32
    %c0_i32_0 = arith.constant 0 : i32
    %c0_i32_1 = arith.constant 0 : i32
    %c0_i32_2 = arith.constant 0 : i32
    return %arg0, %c0_i32, %c0_i32_0, %c0_i32_1 : i32, i32, i32, i32
  }
}

</mosaic_0001>

<llo_original>
// kernel: tpu_custom_call.1
$region0: #{tpu_custom_call.1}
  #allocation0 [shape = 'u32[]', space=smem, size = 0x4, offset = 0x4, fixed_abs, tag = 'smem constant byte address 0x4 - core index']
  #allocation1 [shape = 'u32[144,128]{1,0:T(1,128)}', space=vmem, size = 0x12000, scoped, tag = 'internal scratch']
  %s0 = inlined_call_operand.hbm [shape: f32[16,128], index: 0, kind: input, shape index: {}]
  %s1 = inlined_call_operand.hbm [shape: f32[16,128], index: 1, kind: input, shape index: {}]
  %s2 = inlined_call_operand.hbm [shape: f32[1,3,8,128], index: 2, kind: output, shape index: {}]
  %s3 = sld [smem:[#allocation0]]
  $region30: #{tpu_custom_call.1} parent=0
    _
  %s5 = ssub.s32 1, %s3
  %s6 = scalar_select 0, %s5, %s3
  $region1: #{tpu_custom_call.1} parent=0
    #allocation2 [shape = 'u8[8192]{0}', space=vmem, size = 0x2000, scoped, tag = 'input window, operand 0, single buffered']
    #allocation3 [shape = 's32[1]{0}', space=sflag, size = 0x4, scoped, tag = 'scoped memory for tpu_custom_call.1']
    #allocation4 [shape = 's32[1]{0}', space=sflag, size = 0x4, scoped, tag = 'scoped memory for tpu_custom_call.1']
    #allocation5 [shape = 'u8[8192]{0}', space=vmem, size = 0x2000, scoped, tag = 'input window, operand 1, single buffered']
    #allocation6 [shape = 's32[1]{0}', space=sflag, size = 0x4, scoped, tag = 'scoped memory for tpu_custom_call.1']
    #allocation7 [shape = 'u8[12288]{0}', space=vmem, size = 0x3000, scoped, tag = 'output window, operand 0, single buffered']
    %7 = vsyncpa [#allocation3], 0
    %8 = vsyncpa [#allocation6], 0
    %9 = vsyncpa [#allocation4], 0
    // Predicated region
    $region2: #{tpu_custom_call.1} parent=1 // pred_check
      _
    $region3: #{tpu_custom_call.1} parent=1 // pred_check_branch
      %11 = sbr.rel (0) target = $region5
    $region4: #{tpu_custom_call.1} parent=1 // pred_region
      %s12 = sadd.s32 0, 0
      %s13 = smul.u32 2, %s12
      %s15 = ssub.s32 256, 256
      %16 = vsyncadd [#allocation3], %s15
      %s17 = smul.addr %s13, 128
      %s18 = scalar_lea.hbm %s0, %s17
      %s19 = sshll.u32 [#allocation2], 4
      %s20 = int_to_ptr.vmem [resolvable:$true] %s19
      %25 = dma.hbm_to_vmem [thread:$0]  %s18, 256, %s20, [#allocation3], 128, 128, 8
    $region5: #{tpu_custom_call.1} parent=1 // pred_fallthru
      _
    // Predicated region
    $region6: #{tpu_custom_call.1} parent=1 // pred_check
      _
    $region7: #{tpu_custom_call.1} parent=1 // pred_check_branch
      %27 = sbr.rel (0) target = $region9
    $region8: #{tpu_custom_call.1} parent=1 // pred_region
      %s28 = sadd.s32 0, 0
      %s29 = smul.u32 2, %s28
      %s31 = ssub.s32 256, 256
      %32 = vsyncadd [#allocation6], %s31
      %s33 = smul.addr %s29, 128
      %s34 = scalar_lea.hbm %s1, %s33
      %s35 = sshll.u32 [#allocation5], 4
      %s36 = int_to_ptr.vmem [resolvable:$true] %s35
      %41 = dma.hbm_to_vmem [thread:$0]  %s34, 256, %s36, [#allocation6], 128, 128, 8
    $region9: #{tpu_custom_call.1} parent=1 // pred_fallthru
      _
    // Predicated region
    $region10: #{tpu_custom_call.1} parent=1 // pred_check
      _
    $region11: #{tpu_custom_call.1} parent=1 // pred_check_branch
      %43 = sbr.rel (0) target = $region13
    $region12: #{tpu_custom_call.1} parent=1 // pred_region
      %44 = dma.done [#allocation3], 256
    $region13: #{tpu_custom_call.1} parent=1 // pred_fallthru
      _
    // Predicated region
    $region14: #{tpu_custom_call.1} parent=1 // pred_check
      _
    $region15: #{tpu_custom_call.1} parent=1 // pred_check_branch
      %46 = sbr.rel (0) target = $region17
    $region16: #{tpu_custom_call.1} parent=1 // pred_region
      %47 = dma.done [#allocation6], 256
    $region17: #{tpu_custom_call.1} parent=1 // pred_fallthru
      _
    %s48 = sadd.s32 0, 0
    %s49 = smul.u32 2, %s48
    %s50 = sadd.s32 0, 0
    %s51 = smul.u32 2, %s50
    %p52 = scmp.eq.s32.totalorder 0, 0
    // Predicated region
    $region18: #{tpu_custom_call.1} parent=1 // pred_check
      %p53 = pneg %p52
    $region19: #{tpu_custom_call.1} parent=1 // pred_check_branch
      %55 = sbr.rel (%p53) target = $region21
    $region20: #{tpu_custom_call.1} parent=1 // pred_region
      %56 = vst [vmem:[#allocation7] sm:$0xff] 0.0
      %57 = vst [vmem:[#allocation7 + $0x8] sm:$0xff] 0.0
      %58 = vst [vmem:[#allocation7 + $0x10] sm:$0xff] 0.0
    $region21: #{tpu_custom_call.1} parent=1 // pred_fallthru
      _
    %v59 = vld [vmem:[#allocation2] sm:$0xff]
    %v60 = vld [vmem:[#allocation2 + $0x8] sm:$0xff]
    %v61 = vld [vmem:[#allocation5] sm:$0xff]
    %v62 = vld [vmem:[#allocation5 + $0x8] sm:$0xff]
    %v63 = vand.u32 2147483647, %v59
    %v64 = vand.u32 2147483647, %v60
    %v65 = vsub.f32 0.0, %v63
    %v66 = vsub.f32 0.0, %v64
    %v67 = vmul.f32 %v65, 1.442695
    %v68 = vpow.pop %v67
    %v69 = vmul.f32 %v66, 1.442695
    %v70 = vpow.pop %v69
    %v71 = vmax.f32 %v59, 0.0
    %v72 = vmax.f32 %v60, 0.0
    %v73 = vmul.f32 %v59, %v61
    %v74 = vmul.f32 %v60, %v62
    %v75 = vsub.f32 %v71, %v73
    %v76 = vsub.f32 %v72, %v74
    %v77 = vadd.f32 %v68, 1.0
    %v78 = vlog2.pop %v77
    %v79 = vmul.f32 %v78, 0.6931472
    %v80 = vmul.f32 -0.5, %v68
    %v81 = vadd.f32 %v80, 1.0
    %v82 = vmul.f32 %v81, %v68
    %v83 = vand.u32 2147483647, %v68
    %vm84 = vcmp.lt.f32.partialorder %v83, 0.0004427343
    %v85 = vsel %vm84, %v82, %v79
    %v86 = vadd.f32 %v70, 1.0
    %v87 = vlog2.pop %v86
    %v88 = vmul.f32 %v87, 0.6931472
    %v89 = vmul.f32 -0.5, %v70
    %v90 = vadd.f32 %v89, 1.0
    %v91 = vmul.f32 %v90, %v70
    %v92 = vand.u32 2147483647, %v70
    %vm93 = vcmp.lt.f32.partialorder %v92, 0.0004427343
    %v94 = vsel %vm93, %v91, %v88
    %v95 = vadd.f32 %v75, %v85
    %v96 = vadd.f32 %v76, %v94
    %v97 = vadd.f32 %v68, 1.0
    %v98 = vadd.f32 %v70, 1.0
    %v99 = vrcp.pop %v97
    %v100 = vrcp.pop %v98
    %vm101 = vcmp.ge.f32.partialorder %v59, 0.0
    %vm102 = vcmp.ge.f32.partialorder %v60, 0.0
    %v103 = vmul.f32 %v68, %v99
    %v104 = vmul.f32 %v70, %v100
    %v105 = vsel %vm101, %v99, %v103
    %v106 = vsel %vm102, %v100, %v104
    %v107 = vld [vmem:[#allocation7] sm:$0xff]
    %v108 = vadd.f32 %v95, %v96
    %v109 = vadd.f32 %v107, %v108
    %110 = vst [vmem:[#allocation7] sm:$0xff] %v109
    %s111 = scalar_lea.vmem [#allocation7], 8
    %v112 = vld [vmem:[%s111] sm:$0xff]
    %v113 = vmul.f32 %v61, %v105
    %v114 = vmul.f32 %v62, %v106
    %v115 = vadd.f32 %v113, %v114
    %v116 = vadd.f32 %v112, %v115
    %117 = vst [vmem:[%s111] sm:$0xff] %v116
    %s118 = scalar_lea.vmem [#allocation7], 16
    %v119 = vld [vmem:[%s118] sm:$0xff]
    %v120 = vadd.f32 %v61, %v105
    %v121 = vadd.f32 %v62, %v106
    %v122 = vadd.f32 %v120, %v121
    %v123 = vadd.f32 %v119, %v122
    %124 = vst [vmem:[%s118] sm:$0xff] %v123
    // Predicated region
    $region22: #{tpu_custom_call.1} parent=1 // pred_check
      _
    $region23: #{tpu_custom_call.1} parent=1 // pred_check_branch
      %126 = sbr.rel (0) target = $region25
    $region24: #{tpu_custom_call.1} parent=1 // pred_region
      %s128 = ssub.s32 384, 384
      %129 = vsyncadd [#allocation4], %s128
      %s130 = sshll.u32 [#allocation7], 4
      %s131 = int_to_ptr.vmem [resolvable:$true] %s130
      %136 = dma.vmem_to_hbm [thread:$0]  %s131, 384, %s2, [#allocation4], 128, 128, 8
    $region25: #{tpu_custom_call.1} parent=1 // pred_fallthru
      _
    // Predicated region
    $region26: #{tpu_custom_call.1} parent=1 // pred_check
      _
    $region27: #{tpu_custom_call.1} parent=1 // pred_check_branch
      %138 = sbr.rel (0) target = $region29
    $region28: #{tpu_custom_call.1} parent=1 // pred_region
      %139 = dma.done [#allocation4], 384
    $region29: #{tpu_custom_call.1} parent=1 // pred_fallthru
      _
    %140 = vsyncpa [#allocation3], 1
    %141 = vsyncpa [#allocation6], 1
    %142 = vsyncpa [#allocation4], 1

</llo_original>
